<compile_context>
chip_gen: v5e
topology: v5e:2x2
jax: 0.10.0
libtpu: 0.0.40
codegen_flags: <defaults>
</compile_context>

<pallas_src>
import numpy as np
import jax
import jax.numpy as jnp
from jax.experimental import pallas as pl
from jax.experimental.pallas import tpu as pltpu


# ----------------------------------------------------------------------------
# Deterministic re-implementation of get_vingette_mask (synthetic, in-script).
# size = (C, H, W). shape_type: 'circ' -> circular mask, anything else -> ones.
# ----------------------------------------------------------------------------
def get_vingette_mask(size, shape_type="circ", offset=0.0):
    C, H, W = size
    if shape_type == "circ":
        cy = (H - 1) / 2.0
        cx = (W - 1) / 2.0
        radius = min(H, W) / 2.0 - offset
        yy, xx = np.meshgrid(np.arange(H), np.arange(W), indexing="ij")
        dist2 = (yy - cy) ** 2 + (xx - cx) ** 2
        mask2d = (dist2 <= radius ** 2).astype(np.float32)
        mask = np.broadcast_to(mask2d[None, :, :], (C, H, W)).copy()
    else:  # 'rect' / 'none' -> no vignetting
        mask = np.ones((C, H, W), dtype=np.float32)
    return mask


# Tuning knobs (review-driven).
_TILE_BYTES = 4 * 1024 * 1024          # per x/out tile target
_SMALL_FALLBACK_BYTES = 1 << 20        # below this, fused XLA multiply wins
_VMEM_LIMIT_BYTES = 40 * 1024 * 1024   # safe on v5e/v6e (128 MiB) and v7x (64 MiB)


# ----------------------------------------------------------------------------
# Pallas kernel: lane-dense elementwise multiply.
#   v_ref: (1, bl)  mask tile (broadcast over the bn rows of the x tile)
#   x_ref: (bn, bl) flattened-image tile
# The astype handles torch-style int -> float promotion in-kernel (free on VPU,
# no extra HBM pass); for float inputs it is a no-op.
# ----------------------------------------------------------------------------
def _vingette_kernel(v_ref, x_ref, o_ref):
    o_ref[...] = x_ref[...].astype(o_ref.dtype) * v_ref[...]


def _largest_divisor_multiple(dim, multiple, cap):
    """Largest d <= cap that divides `dim` and is a multiple of `multiple`.
    Returns None if no such d exists."""
    best = None
    cap = min(cap, dim)
    b = multiple
    while b <= cap:
        if dim % b == 0:
            best = b
        b += multiple
    return best


def vingette_apply(x, v, *, force_pallas=False):
    """x: (N, C, H, W) (any (N, ...) works), v: per-image mask with prod == C*H*W."""
    N = x.shape[0]
    L = int(np.prod(x.shape[1:]))
    assert int(np.prod(v.shape)) == L, "mask size must match per-image size"

    # Torch semantics: float32 mask * tensor. For float x we keep x.dtype (the
    # mask is exactly {0,1}); integer x is promoted to float like torch.
    if jnp.issubdtype(x.dtype, jnp.floating):
        out_dtype = x.dtype
    else:
        out_dtype = jnp.promote_types(jnp.float32, x.dtype)

    itemsize = jnp.dtype(out_dtype).itemsize
    total_bytes = N * L * itemsize
    aligned = (L % 128 == 0) and (N % 8 == 0)

    use_pallas = force_pallas or (aligned and total_bytes >= _SMALL_FALLBACK_BYTES)
    if not use_pallas:
        # Tiny or ragged shapes: purely HBM-bound op where pallas_call overhead
        # (or a padding pass) would dominate — let XLA fuse the multiply.
        return (v.reshape((1,) + x.shape[1:]).astype(out_dtype)
                * x.astype(out_dtype))

    # Lane-dense 2D views (contiguous reshapes, layout plumbing only).
    x2 = x.reshape(N, L)
    v2 = v.reshape(1, L).astype(out_dtype)  # no-op when mask is pre-cast/cached

    # --- Tile selection ---------------------------------------------------
    # Lane (last-dim) block: prefer full rows -> each x/out DMA is one
    # contiguous block; only split the lane axis for very large L.
    if L % 128 == 0:
        if L * itemsize <= _TILE_BYTES:
            bl = L
        else:
            bl = _largest_divisor_multiple(L, 128, _TILE_BYTES // (8 * itemsize)) or L
    else:
        bl = L  # full-extent rule (only reachable via force_pallas on ragged L)

    # Row (second-last dim) block: keep one x tile around _TILE_BYTES so
    # double-buffered x + out tiles (+ mask) stay well inside scoped VMEM.
    max_rows = max(8, _TILE_BYTES // (bl * itemsize))
    if N % 8 == 0:
        bn = _largest_divisor_multiple(N, 8, max_rows) or N
    else:
        bn = N  # full-extent rule (small / forced shapes)

    gl, gn = L // bl, N // bn
    # v7x megacore: keep at least 2 steps along a 'parallel' axis when possible.
    if gl * gn < 2 and bn >= 16 and bn % 16 == 0:
        bn //= 2
        gn = N // bn

    out = pl.pallas_call(
        _vingette_kernel,
        out_shape=jax.ShapeDtypeStruct((N, L), out_dtype),
        grid_spec=pltpu.PrefetchScalarGridSpec(
            num_scalar_prefetch=0,
            # Batch axis innermost: the mask tile's block index (0, j) is
            # constant across the inner loop, so the mask is DMA'd from HBM
            # only once per lane block instead of once per grid step.
            grid=(gl, gn),
            in_specs=[
                pl.BlockSpec((1, bl), lambda j, i: (0, j)),    # mask (batch-invariant)
                pl.BlockSpec((bn, bl), lambda j, i: (i, j)),   # x tile
            ],
            out_specs=pl.BlockSpec((bn, bl), lambda j, i: (i, j)),
        ),
        compiler_params=pltpu.CompilerParams(
            dimension_semantics=("parallel", "parallel"),
            vmem_limit_bytes=_VMEM_LIMIT_BYTES,
        ),
    )(v2, x2)

    return out.reshape(x.shape)


class VingetteModuleJax:
    """JAX/Pallas equivalent of the PyTorch VingetteModule."""

    def __init__(self, size, shape, offset):
        V = get_vingette_mask(size, shape_type=shape, offset=offset)
        # PyTorch stores V as a float32 (1, C, H, W) buffer; broadcasting over N
        # is handled by the kernel's batch-invariant mask index_map, so keep
        # (C, H, W) here and cache per-dtype casts (no per-call convert pass).
        self.V = jnp.asarray(V, dtype=jnp.float32)
        self._v_cast_cache = {}

    def _mask_in(self, dtype):
        key = jnp.dtype(dtype)
        if key not in self._v_cast_cache:
            self._v_cast_cache[key] = self.V.astype(key)
        return self._v_cast_cache[key]

    def __call__(self, x, *, force_pallas=False):
        if jnp.issubdtype(x.dtype, jnp.floating):
            out_dtype = x.dtype
        else:
            out_dtype = jnp.promote_types(jnp.float32, x.dtype)
        return vingette_apply(x, self._mask_in(out_dtype), force_pallas=force_pallas)


if __name__ == "__main__":
    # Small shapes consistent with the module: batch=2, channels=4, spatial=16
    N, C, H, W = 2, 4, 16, 16
    key = jax.random.PRNGKey(0)
    x_small = jax.random.normal(key, (N, C, H, W), dtype=jnp.float32)

    module = VingetteModuleJax(size=(C, H, W), shape="circ", offset=2.0)
    ref_small = module.V[None] * x_small

    # 1) Default path for module-sized inputs (small-input XLA fallback).
    out_small = jax.block_until_ready(module(x_small))
    np.testing.assert_allclose(np.asarray(out_small), np.asarray(ref_small),
                               rtol=0, atol=0)

    # 2) Force the Pallas kernel on the same small shape (compile/run check).
    out_forced = jax.block_until_ready(module(x_small, force_pallas=True))
    np.testing.assert_allclose(np.asarray(out_forced), np.asarray(ref_small),
                               rtol=0, atol=0)

    # 3) An aligned shape large enough to take the Pallas path naturally
    #    (exercises the multi-step grid, resident mask tile, megacore split).
    N2, C2, H2, W2 = 16, 4, 64, 64
    x_big = jax.random.normal(jax.random.PRNGKey(0), (N2, C2, H2, W2),
                              dtype=jnp.float32)
    module_big = VingetteModuleJax(size=(C2, H2, W2), shape="circ", offset=2.0)
    out_big = jax.block_until_ready(module_big(x_big))
    ref_big = module_big.V[None] * x_big
    np.testing.assert_allclose(np.asarray(out_big), np.asarray(ref_big),
                               rtol=0, atol=0)

    print("KERNEL_OK")
</pallas_src>

<mosaic_0001>
module attributes {stable_mosaic.version = 11 : i64} {
  func.func @_vingette_kernel(%arg0: i32, %arg1: i32, %arg2: memref<1x1024xf32, #tpu.memory_space<vmem>>, %arg3: memref<2x1024xf32, #tpu.memory_space<vmem>>, %arg4: memref<2x1024xf32, #tpu.memory_space<vmem>>) attributes {dimension_semantics = [#tpu.dimension_semantics<parallel>, #tpu.dimension_semantics<parallel>], iteration_bounds = array<i64: 1, 1>, scalar_prefetch = 0 : i64, scratch_operands = 0 : i64, tpu.core_type = #tpu.core_type<tc>, window_params = [{transform_indices = @transform_0, window_bounds = array<i64: 1, 1024>}, {transform_indices = @transform_1, window_bounds = array<i64: 2, 1024>}, {transform_indices = @transform_2, window_bounds = array<i64: 2, 1024>}]} {
    %c0 = arith.constant 0 : index
    %c0_0 = arith.constant 0 : index
    %0 = vector.load %arg3[%c0, %c0_0] : memref<2x1024xf32, #tpu.memory_space<vmem>>, vector<2x1024xf32>
    %c0_1 = arith.constant 0 : index
    %c0_2 = arith.constant 0 : index
    %1 = vector.load %arg2[%c0_1, %c0_2] : memref<1x1024xf32, #tpu.memory_space<vmem>>, vector<1x1024xf32>
    %2 = vector.broadcast %1 : vector<1x1024xf32> to vector<2x1024xf32>
    %3 = arith.mulf %0, %2 : vector<2x1024xf32>
    %c0_3 = arith.constant 0 : index
    %c0_4 = arith.constant 0 : index
    %4 = vector.load %arg4[%c0_3, %c0_4] : memref<2x1024xf32, #tpu.memory_space<vmem>>, vector<2x1024xf32>
    tpu.vector_store %arg4[%c0_3, %c0_4], %3 {strides = array<i32>} : memref<2x1024xf32, #tpu.memory_space<vmem>>, vector<2x1024xf32>,
    return
  }
  func.func @transform_0(%arg0: i32, %arg1: i32) -> (i32, i32) {
    %c0_i32 = arith.constant 0 : i32
    %c0_i32_0 = arith.constant 0 : i32
    return %c0_i32, %arg0 : i32, i32
  }
  func.func @transform_1(%arg0: i32, %arg1: i32) -> (i32, i32) {
    %c0_i32 = arith.constant 0 : i32
    return %arg1, %arg0 : i32, i32
  }
  func.func @transform_2(%arg0: i32, %arg1: i32) -> (i32, i32) {
    %c0_i32 = arith.constant 0 : i32
    return %arg1, %arg0 : i32, i32
  }
}

</mosaic_0001>

<llo_original>
// kernel: tpu_custom_call.1
$region0: #{tpu_custom_call.1}
  #allocation0 [shape = 'u32[]', space=smem, size = 0x4, offset = 0x4, fixed_abs, tag = 'smem constant byte address 0x4 - core index']
  #allocation1 [shape = 'u32[72,128]{1,0:T(1,128)}', space=vmem, size = 0x9000, scoped, tag = 'internal scratch']
  %s0 = inlined_call_operand.hbm [shape: f32[1,1024], index: 0, kind: input, shape index: {}]
  %s1 = inlined_call_operand.hbm [shape: f32[2,1024], index: 1, kind: input, shape index: {}]
  %s2 = inlined_call_operand.hbm [shape: f32[2,1024], index: 2, kind: output, shape index: {}]
  %s3 = sld [smem:[#allocation0]]
  $region26: #{tpu_custom_call.1} parent=0
    _
  %s5 = ssub.s32 1, %s3
  %s6 = scalar_select 0, %s5, %s3
  $region1: #{tpu_custom_call.1} parent=0
    #allocation2 [shape = 'u8[4096]{0}', space=vmem, size = 0x1000, scoped, tag = 'input window, operand 0, single buffered']
    #allocation3 [shape = 's32[1]{0}', space=sflag, size = 0x4, scoped, tag = 'scoped memory for tpu_custom_call.1']
    #allocation4 [shape = 's32[1]{0}', space=sflag, size = 0x4, scoped, tag = 'scoped memory for tpu_custom_call.1']
    #allocation5 [shape = 'u8[8192]{0}', space=vmem, size = 0x2000, scoped, tag = 'input window, operand 1, single buffered']
    #allocation6 [shape = 's32[1]{0}', space=sflag, size = 0x4, scoped, tag = 'scoped memory for tpu_custom_call.1']
    #allocation7 [shape = 'u8[8192]{0}', space=vmem, size = 0x2000, scoped, tag = 'output window, operand 0, single buffered']
    %7 = vsyncpa [#allocation3], 0
    %8 = vsyncpa [#allocation6], 0
    %9 = vsyncpa [#allocation4], 0
    // Predicated region
    $region2: #{tpu_custom_call.1} parent=1 // pred_check
      _
    $region3: #{tpu_custom_call.1} parent=1 // pred_check_branch
      %11 = sbr.rel (0) target = $region5
    $region4: #{tpu_custom_call.1} parent=1 // pred_region
      %13 = vsyncadd [#allocation3], 0
      %s15 = sshll.u32 %s0, 4
      %s16 = int_to_ptr.hbm [resolvable:$true] %s15
      %s17 = sshll.u32 [#allocation2], 4
      %s18 = int_to_ptr.vmem [resolvable:$true] %s17
      %20 = dma.hbm_to_vmem [thread:$0]  %s16, 128, %s18, [#allocation3]
    $region5: #{tpu_custom_call.1} parent=1 // pred_fallthru
      _
    // Predicated region
    $region6: #{tpu_custom_call.1} parent=1 // pred_check
      _
    $region7: #{tpu_custom_call.1} parent=1 // pred_check_branch
      %22 = sbr.rel (0) target = $region9
    $region8: #{tpu_custom_call.1} parent=1 // pred_region
      %24 = vsyncadd [#allocation6], 0
      %s26 = sshll.u32 %s1, 4
      %s27 = int_to_ptr.hbm [resolvable:$true] %s26
      %s28 = sshll.u32 [#allocation5], 4
      %s29 = int_to_ptr.vmem [resolvable:$true] %s28
      %31 = dma.hbm_to_vmem [thread:$0]  %s27, 256, %s29, [#allocation6]
    $region9: #{tpu_custom_call.1} parent=1 // pred_fallthru
      _
    // Predicated region
    $region10: #{tpu_custom_call.1} parent=1 // pred_check
      _
    $region11: #{tpu_custom_call.1} parent=1 // pred_check_branch
      %33 = sbr.rel (0) target = $region13
    $region12: #{tpu_custom_call.1} parent=1 // pred_region
      %35 = dma.done [#allocation3], 128
    $region13: #{tpu_custom_call.1} parent=1 // pred_fallthru
      _
    // Predicated region
    $region14: #{tpu_custom_call.1} parent=1 // pred_check
      _
    $region15: #{tpu_custom_call.1} parent=1 // pred_check_branch
      %37 = sbr.rel (0) target = $region17
    $region16: #{tpu_custom_call.1} parent=1 // pred_region
      %39 = dma.done [#allocation6], 256
    $region17: #{tpu_custom_call.1} parent=1 // pred_fallthru
      _
    %v40 = vld [vmem:[#allocation5] sm:$0xff]
    %v41 = vld [vmem:[#allocation5 + $0x8] sm:$0xff]
    %v42 = vld [vmem:[#allocation2] sm:$0xff]
    %v44 = vperm.slane %v42, 0
    %v45 = vperm.slane %v42, 1
    %v46 = vperm.slane %v42, 2
    %v47 = vperm.slane %v42, 3
    %v48 = vperm.slane %v42, 4
    %v49 = vperm.slane %v42, 5
    %v50 = vperm.slane %v42, 6
    %v51 = vperm.slane %v42, 7
    %v52 = vrot.slane %v45, 6
    %v53 = vrot.slane %v46, 4
    %v54 = vrot.slane %v47, 2
    %v55 = vrot.slane %v49, 6
    %v56 = vrot.slane %v50, 4
    %v57 = vrot.slane %v51, 2
    %vm58 = vcmask 1041408
    %v59 = vsel %vm58, %v44, %v52
    %vm60 = vcmask 1045508
    %v61 = vsel %vm60, %v53, %v54
    %vm62 = vcmask 1043456
    %v63 = vsel %vm62, %v59, %v61
    %v64 = vsel %vm58, %v48, %v55
    %v65 = vsel %vm60, %v56, %v57
    %v66 = vsel %vm62, %v64, %v65
    %v69 = vmul.f32 %v40, %v63
    %v70 = vmul.f32 %v41, %v66
    %71 = vst [vmem:[#allocation7] sm:$0xff] %v69
    %72 = vst [vmem:[#allocation7 + $0x8] sm:$0xff] %v70
    // Predicated region
    $region18: #{tpu_custom_call.1} parent=1 // pred_check
      _
    $region19: #{tpu_custom_call.1} parent=1 // pred_check_branch
      %74 = sbr.rel (0) target = $region21
    $region20: #{tpu_custom_call.1} parent=1 // pred_region
      %76 = vsyncadd [#allocation4], 0
      %s78 = sshll.u32 [#allocation7], 4
      %s79 = int_to_ptr.vmem [resolvable:$true] %s78
      %s80 = sshll.u32 %s2, 4
      %s81 = int_to_ptr.hbm [resolvable:$true] %s80
      %83 = dma.vmem_to_hbm [thread:$0]  %s79, 256, %s81, [#allocation4]
    $region21: #{tpu_custom_call.1} parent=1 // pred_fallthru
      _
    // Predicated region
    $region22: #{tpu_custom_call.1} parent=1 // pred_check
      _
    $region23: #{tpu_custom_call.1} parent=1 // pred_check_branch
      %85 = sbr.rel (0) target = $region25
    $region24: #{tpu_custom_call.1} parent=1 // pred_region
      %87 = dma.done [#allocation4], 256
    $region25: #{tpu_custom_call.1} parent=1 // pred_fallthru
      _
    %88 = vsyncpa [#allocation3], 1
    %89 = vsyncpa [#allocation6], 1
    %90 = vsyncpa [#allocation4], 1

</llo_original>
